<compile_context>
chip_gen: v7x
topology: tpu7x:2x2x1
jax: 0.10.0
libtpu: 0.0.40
codegen_flags: <defaults>
</compile_context>

<pallas_src>
import jax
import jax.numpy as jnp
from jax.experimental import pallas as pl
from jax.experimental.pallas import tpu as pltpu


def simple_gate_kernel(x1_ref, x2_ref, o_ref):
    # All refs are identically-shaped VMEM tiles: pure elementwise multiply.
    o_ref[...] = x1_ref[...] * x2_ref[...]


def simple_gate(x, *, tile_elems=1024 * 128):
    """Pallas implementation of SimpleGate(dim=1) for NCHW input."""
    n, c, h, w = x.shape
    assert c % 2 == 0, "channel dim must be even for chunk(2, dim=1)"
    c_half = c // 2
    m = c_half * h * w

    itemsize = jnp.dtype(x.dtype).itemsize
    cost = pl.CostEstimate(
        flops=n * m,                           # one multiply per output element
        transcendentals=0,
        bytes_accessed=3 * n * m * itemsize,   # read both halves, write one
    )
    compiler_params = pltpu.CompilerParams(
        dimension_semantics=("parallel", "parallel"),
    )

    if m % 128 == 0:
        # Preferred path: true (sublane, lane) blocks -> full 8x128 vreg
        # utilization and unmasked, lane-dense stores.
        r = m // 128
        x4 = x.reshape(n, 2, r, 128)           # free reshape of contiguous NCHW
        tile_r = min(r, max(tile_elems // 128, 8))   # 1024 rows (mult. of 8) or full
        grid = (n, pl.cdiv(r, tile_r))

        out = pl.pallas_call(
            simple_gate_kernel,
            out_shape=jax.ShapeDtypeStruct((n, 1, r, 128), x.dtype),
            grid_spec=pltpu.PrefetchScalarGridSpec(
                num_scalar_prefetch=0,
                grid=grid,
                in_specs=[
                    # First channel half: own double-buffered DMA stream.
                    pl.BlockSpec((1, 1, tile_r, 128), lambda i, j: (i, 0, j, 0)),
                    # Second channel half: own double-buffered DMA stream.
                    pl.BlockSpec((1, 1, tile_r, 128), lambda i, j: (i, 1, j, 0)),
                ],
                out_specs=pl.BlockSpec((1, 1, tile_r, 128),
                                       lambda i, j: (i, 0, j, 0)),
            ),
            compiler_params=compiler_params,
            cost_estimate=cost,
        )(x4, x4)
    else:
        # Fallback: flat lane-major tiling of the whole half (still lane-dense
        # for the bulk; only the final partial block is masked).
        x3 = x.reshape(n, 2, m)
        tile_m = m if m <= tile_elems else tile_elems
        grid = (n, pl.cdiv(m, tile_m))

        out = pl.pallas_call(
            simple_gate_kernel,
            out_shape=jax.ShapeDtypeStruct((n, 1, m), x.dtype),
            grid_spec=pltpu.PrefetchScalarGridSpec(
                num_scalar_prefetch=0,
                grid=grid,
                in_specs=[
                    pl.BlockSpec((1, 1, tile_m), lambda i, j: (i, 0, j)),
                    pl.BlockSpec((1, 1, tile_m), lambda i, j: (i, 1, j)),
                ],
                out_specs=pl.BlockSpec((1, 1, tile_m), lambda i, j: (i, 0, j)),
            ),
            compiler_params=compiler_params,
            cost_estimate=cost,
        )(x3, x3)

    return out.reshape(n, c_half, h, w)


if __name__ == "__main__":
    key = jax.random.PRNGKey(0)
    x = jax.random.normal(key, (2, 4, 16, 16), dtype=jnp.float32)

    out = simple_gate(x)
    out = jax.block_until_ready(out)

    # Reference in plain JAX (mirrors torch.chunk(2, dim=1) then multiply).
    c_half = x.shape[1] // 2
    ref = x[:, :c_half] * x[:, c_half:]

    assert out.shape == (2, 2, 16, 16), out.shape
    assert jnp.allclose(out, ref, atol=1e-6), "mismatch vs reference"

    # Exercise the fallback (M not a multiple of 128) for correctness too.
    x_odd = jax.random.normal(key, (2, 2, 5, 7), dtype=jnp.float32)
    out_odd = jax.block_until_ready(simple_gate(x_odd))
    ref_odd = x_odd[:, :1] * x_odd[:, 1:]
    assert jnp.allclose(out_odd, ref_odd, atol=1e-6), "fallback mismatch"

    print("KERNEL_OK")
</pallas_src>

<mosaic_0001>
module attributes {stable_mosaic.version = 11 : i64} {
  func.func @simple_gate_kernel(%arg0: i32, %arg1: i32, %arg2: memref<1x1x4x128xf32, #tpu.memory_space<vmem>>, %arg3: memref<1x1x4x128xf32, #tpu.memory_space<vmem>>, %arg4: memref<1x1x4x128xf32, #tpu.memory_space<vmem>>) attributes {dimension_semantics = [#tpu.dimension_semantics<parallel>, #tpu.dimension_semantics<parallel>], iteration_bounds = array<i64: 2, 1>, scalar_prefetch = 0 : i64, scratch_operands = 0 : i64, tpu.core_type = #tpu.core_type<tc>, window_params = [{transform_indices = @transform_0, window_bounds = array<i64: 1, 1, 4, 128>}, {transform_indices = @transform_1, window_bounds = array<i64: 1, 1, 4, 128>}, {transform_indices = @transform_2, window_bounds = array<i64: 1, 1, 4, 128>}]} {
    %c0 = arith.constant 0 : index
    %c0_0 = arith.constant 0 : index
    %c0_1 = arith.constant 0 : index
    %c0_2 = arith.constant 0 : index
    %0 = vector.load %arg2[%c0, %c0_0, %c0_1, %c0_2] : memref<1x1x4x128xf32, #tpu.memory_space<vmem>>, vector<1x1x4x128xf32>
    %c0_3 = arith.constant 0 : index
    %c0_4 = arith.constant 0 : index
    %c0_5 = arith.constant 0 : index
    %c0_6 = arith.constant 0 : index
    %1 = vector.load %arg3[%c0_3, %c0_4, %c0_5, %c0_6] : memref<1x1x4x128xf32, #tpu.memory_space<vmem>>, vector<1x1x4x128xf32>
    %2 = arith.mulf %0, %1 : vector<1x1x4x128xf32>
    %c0_7 = arith.constant 0 : index
    %c0_8 = arith.constant 0 : index
    %c0_9 = arith.constant 0 : index
    %c0_10 = arith.constant 0 : index
    %3 = vector.load %arg4[%c0_7, %c0_8, %c0_9, %c0_10] : memref<1x1x4x128xf32, #tpu.memory_space<vmem>>, vector<1x1x4x128xf32>
    tpu.vector_store %arg4[%c0_7, %c0_8, %c0_9, %c0_10], %2 {strides = array<i32>} : memref<1x1x4x128xf32, #tpu.memory_space<vmem>>, vector<1x1x4x128xf32>,
    return
  }
  func.func @transform_0(%arg0: i32, %arg1: i32) -> (i32, i32, i32, i32) {
    %c0_i32 = arith.constant 0 : i32
    %c0_i32_0 = arith.constant 0 : i32
    %c0_i32_1 = arith.constant 0 : i32
    return %arg0, %c0_i32, %arg1, %c0_i32_0 : i32, i32, i32, i32
  }
  func.func @transform_1(%arg0: i32, %arg1: i32) -> (i32, i32, i32, i32) {
    %c1_i32 = arith.constant 1 : i32
    %c0_i32 = arith.constant 0 : i32
    %c0_i32_0 = arith.constant 0 : i32
    return %arg0, %c1_i32, %arg1, %c0_i32 : i32, i32, i32, i32
  }
  func.func @transform_2(%arg0: i32, %arg1: i32) -> (i32, i32, i32, i32) {
    %c0_i32 = arith.constant 0 : i32
    %c0_i32_0 = arith.constant 0 : i32
    %c0_i32_1 = arith.constant 0 : i32
    return %arg0, %c0_i32, %arg1, %c0_i32_0 : i32, i32, i32, i32
  }
}

</mosaic_0001>

<llo_original>
// kernel: tpu_custom_call.1
$region0: #{tpu_custom_call.1}
  #allocation0 [shape = 'u32[]', space=smem, size = 0x4, offset = 0x4, fixed_abs, tag = 'smem constant byte address 0x4 - core index']
  #allocation1 [shape = 'u32[144,128]{1,0:T(1,128)}', space=vmem, size = 0x12000, scoped, tag = 'internal scratch']
  %s0 = inlined_call_operand.hbm [shape: f32[2,2,4,128], index: 0, kind: input, shape index: {}]
  %s1 = inlined_call_operand.hbm [shape: f32[2,2,4,128], index: 1, kind: input, shape index: {}]
  %s2 = inlined_call_operand.hbm [shape: f32[2,1,4,128], index: 2, kind: output, shape index: {}]
  %s3 = sld [smem:[#allocation0]]
  $region49: #{tpu_custom_call.1} parent=0
    _
  %s5 = ssub.s32 1, %s3
  %s6 = scalar_select 0, %s5, %s3
  $region1: #{tpu_custom_call.1} parent=0
    #allocation2 [shape = 'u8[4096]{0}', space=vmem, size = 0x1000, scoped, tag = 'input window, operand 0']
    #allocation3 [shape = 's32[2]{0}', space=sflag, size = 0x8, scoped, tag = 'scoped memory for tpu_custom_call.1']
    #allocation4 [shape = 's32[2]{0}', space=sflag, size = 0x8, scoped, tag = 'scoped memory for tpu_custom_call.1']
    #allocation5 [shape = 'u8[4096]{0}', space=vmem, size = 0x1000, scoped, tag = 'input window, operand 1']
    #allocation6 [shape = 's32[2]{0}', space=sflag, size = 0x8, scoped, tag = 'scoped memory for tpu_custom_call.1']
    #allocation7 [shape = 'u8[4096]{0}', space=vmem, size = 0x1000, scoped, tag = 'output window, operand 0']
    %7 = vsyncpa [#allocation3], 0
    %s8 = scalar_lea.sflag [#allocation3], 1
    %9 = vsyncpa %s8, 0
    %10 = vsyncpa [#allocation6], 0
    %s11 = scalar_lea.sflag [#allocation6], 1
    %12 = vsyncpa %s11, 0
    %13 = vsyncpa [#allocation4], 0
    %s14 = scalar_lea.sflag [#allocation4], 1
    %15 = vsyncpa %s14, 0
    loop: start=0, step=1, limit=4
    $region2: #{tpu_custom_call.1} parent=1 // loop_pre_header
      _
    $region3: #{tpu_custom_call.1} parent=1 // loop_header
      %s17 = sphi 0, %s21
      %p18 = scmp.ge.s32.totalorder %s17, 4
      %s24 = sphi 0, %s36
      %s25 = sphi 0, %s32
      %s26 = sphi 0, %s24
      %s27 = sphi 0, %s25
      %s28 = sphi 0, %s26
      %s29 = sphi 0, %s27
      %s41 = sphi 0, %s43
      %s44 = sphi 0, %s41
      %s45 = sphi 0, %s44
      %s61 = sphi 0, %s45
      %s69 = sphi 0, %s71
      %s72 = sphi 0, %s69
      %s73 = sphi 0, %s72
      %s89 = sphi 0, %s73
      %s97 = sphi 0, %s99
      %s100 = sphi 0, %s97
      %s101 = sphi 0, %s100
      %s117 = sphi 0, %s101
    $region4: #{tpu_custom_call.1} parent=1 // loop_header_branch
      %20 = sbr.rel (%p18) target = $region8
    $region5: #{tpu_custom_call.1} parent=1 // loop_body
      %s22 = ssub.s32 %s17, 1
      %s23 = ssub.s32 %s17, 2
      %s30 = sadd.s32 1, %s25
      %p31 = scmp.ge.s32.totalorder %s30, 1
      %s32 = scalar_select %p31, 0, %s30
      %s33 = sadd.s32 1, %s24
      %s34 = scalar_select %p31, %s33, %s24
      %p35 = scmp.ge.s32.totalorder %s34, 2
      %s36 = scalar_select %p35, 0, %s34
      %s37 = ssub.s32 %s24, %s36
      %s38 = ssub.s32 %s25, %s32
      %s39 = sor.u32 %s37, %s38
      %p40 = scmp.eq.s32.totalorder %s39, 0
      %s42 = sadd.s32 %s41, 1
      %s43 = scalar_select %p40, %s41, %s42
      %p46 = pneg %p40
      %p47 = scmp.eq.s32.totalorder %s17, 1
      %p48 = por %p46, %p47
      %p49 = scmp.ne.s32.totalorder %s41, %s44
      %p50 = scmp.eq.s32.totalorder %s17, 0
      %p51 = por %p49, %p50
      %p52 = scmp.ne.s32.totalorder %s41, %s44
      %p53 = scmp.eq.s32.totalorder %s22, 1
      %p54 = por %p52, %p53
      %p55 = scmp.ne.s32.totalorder %s44, %s45
      %p56 = scmp.eq.s32.totalorder %s22, 0
      %p57 = por %p55, %p56
      %p58 = scmp.ne.s32.totalorder %s44, %s45
      %p59 = scmp.eq.s32.totalorder %s23, 1
      %p60 = por %p58, %p59
      %p62 = scmp.ne.s32.totalorder %s45, %s61
      %p63 = scmp.eq.s32.totalorder %s23, 0
      %p64 = por %p62, %p63
      %s65 = ssub.s32 %s24, %s36
      %s66 = ssub.s32 %s25, %s32
      %s67 = sor.u32 %s65, %s66
      %p68 = scmp.eq.s32.totalorder %s67, 0
      %s70 = sadd.s32 %s69, 1
      %s71 = scalar_select %p68, %s69, %s70
      %p74 = pneg %p68
      %p75 = scmp.eq.s32.totalorder %s17, 1
      %p76 = por %p74, %p75
      %p77 = scmp.ne.s32.totalorder %s69, %s72
      %p78 = scmp.eq.s32.totalorder %s17, 0
      %p79 = por %p77, %p78
      %p80 = scmp.ne.s32.totalorder %s69, %s72
      %p81 = scmp.eq.s32.totalorder %s22, 1
      %p82 = por %p80, %p81
      %p83 = scmp.ne.s32.totalorder %s72, %s73
      %p84 = scmp.eq.s32.totalorder %s22, 0
      %p85 = por %p83, %p84
      %p86 = scmp.ne.s32.totalorder %s72, %s73
      %p87 = scmp.eq.s32.totalorder %s23, 1
      %p88 = por %p86, %p87
      %p90 = scmp.ne.s32.totalorder %s73, %s89
      %p91 = scmp.eq.s32.totalorder %s23, 0
      %p92 = por %p90, %p91
      %s93 = ssub.s32 %s24, %s36
      %s94 = ssub.s32 %s25, %s32
      %s95 = sor.u32 %s93, %s94
      %p96 = scmp.eq.s32.totalorder %s95, 0
      %s98 = sadd.s32 %s97, 1
      %s99 = scalar_select %p96, %s97, %s98
      %p102 = pneg %p96
      %p103 = scmp.eq.s32.totalorder %s17, 1
      %p104 = por %p102, %p103
      %p105 = scmp.ne.s32.totalorder %s97, %s100
      %p106 = scmp.eq.s32.totalorder %s17, 0
      %p107 = por %p105, %p106
      %p108 = scmp.ne.s32.totalorder %s97, %s100
      %p109 = scmp.eq.s32.totalorder %s22, 1
      %p110 = por %p108, %p109
      %p111 = scmp.ne.s32.totalorder %s100, %s101
      %p112 = scmp.eq.s32.totalorder %s22, 0
      %p113 = por %p111, %p112
      %p114 = scmp.ne.s32.totalorder %s100, %s101
      %p115 = scmp.eq.s32.totalorder %s23, 1
      %p116 = por %p114, %p115
      %p118 = scmp.ne.s32.totalorder %s101, %s117
      %p119 = scmp.eq.s32.totalorder %s23, 0
      %p120 = por %p118, %p119
      %p121 = scmp.le.s32.totalorder 1, %s17
      %p122 = scmp.lt.s32.totalorder %s17, 3
      %p123 = pnand %p121, %p122
      %p124 = pneg %p123
      // Predicated region
      $region9: #{tpu_custom_call.1} parent=5 // pred_check
        _
      $region10: #{tpu_custom_call.1} parent=5 // pred_check_branch
        %126 = sbr.rel (%p123) target = $region12
      $region11: #{tpu_custom_call.1} parent=5 // pred_region
        %s127 = ssub.s32 %s17, 1
      $region12: #{tpu_custom_call.1} parent=5 // pred_fallthru
        _
      %p128 = scmp.lt.s32.totalorder %s17, 2
      // Predicated region
      $region13: #{tpu_custom_call.1} parent=5 // pred_check
        %p129 = pneg %p128
      $region14: #{tpu_custom_call.1} parent=5 // pred_check_branch
        %131 = sbr.rel (%p129) target = $region16
      $region15: #{tpu_custom_call.1} parent=5 // pred_region
        // Predicated region
        $region17: #{tpu_custom_call.1} parent=15 // pred_check
          %p132 = pneg %p51
        $region18: #{tpu_custom_call.1} parent=15 // pred_check_branch
          %134 = sbr.rel (%p132) target = $region20
        $region19: #{tpu_custom_call.1} parent=15 // pred_region
          %s135 = sand.u32 %s41, 1
          %s136 = scalar_lea.sflag [#allocation3], %s135
          %s137 = sand.u32 %s41, 1
          %s138 = smul.addr %s137, 4
          %s139 = scalar_lea.vmem [#allocation2], %s138
          %s141 = ssub.s32 64, 64
          %142 = vsyncadd %s136, %s141
          %s143 = smul.addr %s24, 2
          %s144 = sadd.s32 %s25, %s143
          %s145 = smul.addr %s144, 64
          %s146 = scalar_lea.hbm %s0, %s145
          %s148 = sshll.u32 %s139, 4
          %s149 = int_to_ptr.vmem [resolvable:$true] %s148
          %151 = dma.hbm_to_vmem [thread:$0]  %s146, 64, %s149, %s136
        $region20: #{tpu_custom_call.1} parent=15 // pred_fallthru
          _
        // Predicated region
        $region21: #{tpu_custom_call.1} parent=15 // pred_check
          %p152 = pneg %p79
        $region22: #{tpu_custom_call.1} parent=15 // pred_check_branch
          %154 = sbr.rel (%p152) target = $region24
        $region23: #{tpu_custom_call.1} parent=15 // pred_region
          %s155 = sand.u32 %s69, 1
          %s156 = scalar_lea.sflag [#allocation6], %s155
          %s157 = sand.u32 %s69, 1
          %s158 = smul.addr %s157, 4
          %s159 = scalar_lea.vmem [#allocation5], %s158
          %s161 = ssub.s32 64, 64
          %162 = vsyncadd %s156, %s161
          %s163 = sadd.s32 %s25, 1
          %s164 = smul.addr %s24, 2
          %s165 = sadd.s32 %s163, %s164
          %s166 = smul.addr %s165, 64
          %s167 = scalar_lea.hbm %s1, %s166
          %s169 = sshll.u32 %s159, 4
          %s170 = int_to_ptr.vmem [resolvable:$true] %s169
          %172 = dma.hbm_to_vmem [thread:$0]  %s167, 64, %s170, %s156
        $region24: #{tpu_custom_call.1} parent=15 // pred_fallthru
          _
      $region16: #{tpu_custom_call.1} parent=5 // pred_fallthru
        _
      %p173 = scmp.le.s32.totalorder 1, %s17
      %p174 = scmp.lt.s32.totalorder %s17, 3
      %p175 = pnand %p173, %p174
      %p176 = pneg %p175
      // Predicated region
      $region25: #{tpu_custom_call.1} parent=5 // pred_check
        _
      $region26: #{tpu_custom_call.1} parent=5 // pred_check_branch
        %178 = sbr.rel (%p175) target = $region28
      $region27: #{tpu_custom_call.1} parent=5 // pred_region
        %s179 = ssub.s32 %s17, 1
        %s180 = sand.u32 %s44, 1
        %s181 = scalar_lea.sflag [#allocation3], %s180
        %s182 = sand.u32 %s44, 1
        %s183 = smul.addr %s182, 4
        %s184 = scalar_lea.vmem [#allocation2], %s183
        // Predicated region
        $region29: #{tpu_custom_call.1} parent=27 // pred_check
          %p185 = pneg %p57
        $region30: #{tpu_custom_call.1} parent=27 // pred_check_branch
          %187 = sbr.rel (%p185) target = $region32
        $region31: #{tpu_custom_call.1} parent=27 // pred_region
          %188 = dma.done %s181, 64
        $region32: #{tpu_custom_call.1} parent=27 // pred_fallthru
          _
        %s189 = sand.u32 %s72, 1
        %s190 = scalar_lea.sflag [#allocation6], %s189
        %s191 = sand.u32 %s72, 1
        %s192 = smul.addr %s191, 4
        %s193 = scalar_lea.vmem [#allocation5], %s192
        // Predicated region
        $region33: #{tpu_custom_call.1} parent=27 // pred_check
          %p194 = pneg %p85
        $region34: #{tpu_custom_call.1} parent=27 // pred_check_branch
          %196 = sbr.rel (%p194) target = $region36
        $region35: #{tpu_custom_call.1} parent=27 // pred_region
          %197 = dma.done %s190, 64
        $region36: #{tpu_custom_call.1} parent=27 // pred_fallthru
          _
        %s198 = sand.u32 %s44, 1
        %s199 = scalar_lea.sflag [#allocation3], %s198
        %s200 = sand.u32 %s44, 1
        %s201 = smul.addr %s200, 4
        %s202 = scalar_lea.vmem [#allocation2], %s201
        %p203 = pneg %p57
        %p204 = pneg %p54
        %s205 = sand.u32 %s72, 1
        %s206 = scalar_lea.sflag [#allocation6], %s205
        %s207 = sand.u32 %s72, 1
        %s208 = smul.addr %s207, 4
        %s209 = scalar_lea.vmem [#allocation5], %s208
        %p210 = pneg %p85
        %p211 = pneg %p82
        %p212 = pneg %p113
        %p213 = pneg %p110
        %s214 = sand.u32 %s100, 1
        %s215 = scalar_lea.sflag [#allocation4], %s214
        %s216 = sand.u32 %s100, 1
        %s217 = smul.addr %s216, 4
        %s218 = scalar_lea.vmem [#allocation7], %s217
        %v219 = vld [vmem:[%s184] sm:$0xf]
        %v220 = vld [vmem:[%s193] sm:$0xf]
        %v221 = vmul.f32 %v219, %v220
        %222 = vst [vmem:[%s218] sm:$0xf] %v221
        %s223 = sand.u32 %s100, 1
        %s224 = scalar_lea.sflag [#allocation4], %s223
        %s225 = sand.u32 %s100, 1
        %s226 = smul.addr %s225, 4
        %s227 = scalar_lea.vmem [#allocation7], %s226
        // Predicated region
        $region37: #{tpu_custom_call.1} parent=27 // pred_check
          %p228 = pneg %p110
        $region38: #{tpu_custom_call.1} parent=27 // pred_check_branch
          %230 = sbr.rel (%p228) target = $region40
        $region39: #{tpu_custom_call.1} parent=27 // pred_region
          %s232 = ssub.s32 64, 64
          %233 = vsyncadd %s224, %s232
          %s234 = sadd.s32 %s27, %s26
          %s235 = smul.addr %s234, 64
          %s236 = scalar_lea.hbm %s2, %s235
          %s238 = sshll.u32 %s227, 4
          %s239 = int_to_ptr.vmem [resolvable:$true] %s238
          %241 = dma.vmem_to_hbm [thread:$0]  %s239, 64, %s236, %s224
        $region40: #{tpu_custom_call.1} parent=27 // pred_fallthru
          _
      $region28: #{tpu_custom_call.1} parent=5 // pred_fallthru
        _
      %p242 = scmp.le.s32.totalorder 2, %s17
      // Predicated region
      $region41: #{tpu_custom_call.1} parent=5 // pred_check
        %p243 = pneg %p242
      $region42: #{tpu_custom_call.1} parent=5 // pred_check_branch
        %245 = sbr.rel (%p243) target = $region44
      $region43: #{tpu_custom_call.1} parent=5 // pred_region
        %s246 = ssub.s32 %s17, 2
        // Predicated region
        $region45: #{tpu_custom_call.1} parent=43 // pred_check
          %p247 = pneg %p116
        $region46: #{tpu_custom_call.1} parent=43 // pred_check_branch
          %249 = sbr.rel (%p247) target = $region48
        $region47: #{tpu_custom_call.1} parent=43 // pred_region
          %s250 = sand.u32 %s101, 1
          %s251 = scalar_lea.sflag [#allocation4], %s250
          %s252 = sand.u32 %s101, 1
          %s253 = smul.addr %s252, 4
          %s254 = scalar_lea.vmem [#allocation7], %s253
          %255 = dma.done %s251, 64
        $region48: #{tpu_custom_call.1} parent=43 // pred_fallthru
          _
      $region44: #{tpu_custom_call.1} parent=5 // pred_fallthru
        _
    $region6: #{tpu_custom_call.1} parent=1 // loop_footer
      %s21 = sadd.s32 1, %s17
    $region7: #{tpu_custom_call.1} parent=1 // loop_footer_branch
      %16 = sbr.rel target = $region3
    $region8: #{tpu_custom_call.1} parent=1 // loop_exit
      _
    %256 = vsyncpa [#allocation3], 1
    %s257 = scalar_lea.sflag [#allocation3], 1
    %258 = vsyncpa %s257, 1
    %259 = vsyncpa [#allocation6], 1
    %s260 = scalar_lea.sflag [#allocation6], 1
    %261 = vsyncpa %s260, 1
    %262 = vsyncpa [#allocation4], 1
    %s263 = scalar_lea.sflag [#allocation4], 1
    %264 = vsyncpa %s263, 1

</llo_original>
